<compile_context>
chip_gen: v5e
topology: v5e:2x2
jax: 0.10.0
libtpu: 0.0.40
codegen_flags: <defaults>
</compile_context>

<pallas_src>
import jax
import jax.numpy as jnp
from jax.experimental import pallas as pl
from jax.experimental.pallas import tpu as pltpu

MASK_RATIO = 0.5  # fixed in the module's __init__


def _mask_kernel(x_ref, keep_ref, xm_ref, km_ref):
    # x_ref:    (1, c_blk, ts)  input activations
    # keep_ref: (1, 1,     ts)  int8 keep mask, shared across channels
    # xm_ref:   (1, c_blk, ts)  masked activations
    # km_ref:   (1, c_blk, ts)  channel-broadcast keep mask (x.dtype)
    keep = keep_ref[...].astype(xm_ref.dtype)          # {0, 1} in x.dtype
    xm_ref[...] = x_ref[...] * keep                    # sublane broadcast over channels
    km_ref[...] = jnp.broadcast_to(keep, km_ref.shape)  # reuse the VMEM keep tile


def _pad8(n: int) -> int:
    return ((n + 7) // 8) * 8


def _choose_tiling(b: int, c: int, s_pad: int, itemsize: int):
    """Pick (c_blk, ts): padded (1, c_blk, ts) x-block <= ~4 MiB, ts a multiple
    of 128, and >= 4 total grid steps so both v7x TensorCores get work."""
    target = 4 << 20  # per-x-block budget

    # Channel block: keep all channels unless even a 128-lane tile would blow the budget.
    if _pad8(c) * 128 * itemsize <= target:
        c_blk = c
    else:
        c_blk = max(8, (target // (128 * itemsize)) // 8 * 8)
    c_pad = _pad8(c_blk)
    n_cb = -(-c // c_blk)

    # Largest multiple-of-128 lane tile fitting the budget.
    ts = max(128, min(s_pad, (target // (c_pad * itemsize)) // 128 * 128))

    # Ensure enough grid steps for megacore sharding on v7x.
    def n_steps(t):
        return b * n_cb * (-(-s_pad // t))

    while n_steps(ts) < 4 and ts > 128:
        ts = max(128, (ts // 2) // 128 * 128)
    return c_blk, ts


def simple_mask(x: jax.Array, key: jax.Array):
    """Pallas implementation of SimpleMask.forward.

    Accepts (c, h, w) or (b, c, h, w); returns (x_masked, keep_mask), both of
    shape (b, c, h, w) and dtype of x.
    """
    if x.ndim == 3:
        x = x[None]
    b, c, h, w = x.shape
    s = h * w
    itemsize = jnp.dtype(x.dtype).itemsize

    # keep = 1 - (rand > mask_ratio) == (rand <= mask_ratio); int8 to cut HBM traffic.
    u = jax.random.uniform(key, (b, h, w), dtype=jnp.float32)
    keep_i8 = (u <= MASK_RATIO).astype(jnp.int8).reshape(b, 1, s)

    # Lane-dense layout, padded so the lane dim is a multiple of 128.
    s_pad = -(-s // 128) * 128
    x_r = x.reshape(b, c, s)
    if s_pad != s:
        x_r = jnp.pad(x_r, ((0, 0), (0, 0), (0, s_pad - s)))
        keep_i8 = jnp.pad(keep_i8, ((0, 0), (0, 0), (0, s_pad - s)))

    c_blk, ts = _choose_tiling(b, c, s_pad, itemsize)
    n_cb = -(-c // c_blk)
    n_ts = -(-s_pad // ts)
    grid = (b, n_cb, n_ts)

    # VMEM budget from sublane-PADDED block bytes: x in + 2 outs + int8 keep,
    # double-buffered plus slack.  Clamp to <= 48 MiB (fits v7x 64 MiB physical),
    # floor at 32 MiB (raises v5e's 16 MiB default scoped limit).
    c_pad = _pad8(c_blk)
    x_blk_bytes = c_pad * ts * itemsize
    keep_blk_bytes = 32 * ts  # int8 pads to 32 sublanes
    per_step = 3 * x_blk_bytes + keep_blk_bytes
    vmem_limit = int(min(48 << 20, max(32 << 20, 3 * per_step)))

    x_masked, keep_mask = pl.pallas_call(
        _mask_kernel,
        out_shape=(
            jax.ShapeDtypeStruct((b, c, s_pad), x.dtype),
            jax.ShapeDtypeStruct((b, c, s_pad), x.dtype),
        ),
        grid_spec=pltpu.PrefetchScalarGridSpec(
            num_scalar_prefetch=0,
            grid=grid,
            in_specs=[
                pl.BlockSpec((1, c_blk, ts), lambda i, cb, j: (i, cb, j)),  # x tile
                pl.BlockSpec((1, 1, ts), lambda i, cb, j: (i, 0, j)),       # keep tile
            ],
            out_specs=[
                pl.BlockSpec((1, c_blk, ts), lambda i, cb, j: (i, cb, j)),  # x_masked
                pl.BlockSpec((1, c_blk, ts), lambda i, cb, j: (i, cb, j)),  # keep_mask
            ],
        ),
        compiler_params=pltpu.CompilerParams(
            dimension_semantics=("parallel", "parallel", "parallel"),
            vmem_limit_bytes=vmem_limit,
        ),
    )(x_r, keep_i8)

    if s_pad != s:
        x_masked = x_masked[:, :, :s]
        keep_mask = keep_mask[:, :, :s]
    return x_masked.reshape(b, c, h, w), keep_mask.reshape(b, c, h, w)


if __name__ == "__main__":
    key = jax.random.PRNGKey(0)
    kx, km_key = jax.random.split(key)
    x = jax.random.normal(kx, (2, 4, 16, 16), dtype=jnp.float32)

    x_masked, keep_mask = simple_mask(x, km_key)
    jax.block_until_ready((x_masked, keep_mask))

    # Semantic checks.
    assert x_masked.shape == x.shape and keep_mask.shape == x.shape
    assert x_masked.dtype == x.dtype and keep_mask.dtype == x.dtype
    km_h = jax.device_get(keep_mask)
    # Mask is {0, 1} and identical across the channel axis.
    assert ((km_h == 0.0) | (km_h == 1.0)).all()
    assert (km_h == km_h[:, :1]).all()
    # Masked output equals x * keep_mask exactly.
    assert bool(jnp.array_equal(x_masked, x * keep_mask))
    # Roughly half of the positions kept (loose sanity bound).
    frac = km_h[:, 0].mean()
    assert 0.2 < frac < 0.8
    print("KERNEL_OK")
</pallas_src>

<mosaic_0001>
module attributes {stable_mosaic.version = 11 : i64} {
  func.func @_mask_kernel(%arg0: i32, %arg1: i32, %arg2: i32, %arg3: memref<1x4x128xf32, #tpu.memory_space<vmem>>, %arg4: memref<1x1x128xi8, #tpu.memory_space<vmem>>, %arg5: memref<1x4x128xf32, #tpu.memory_space<vmem>>, %arg6: memref<1x4x128xf32, #tpu.memory_space<vmem>>) attributes {dimension_semantics = [#tpu.dimension_semantics<parallel>, #tpu.dimension_semantics<parallel>, #tpu.dimension_semantics<parallel>], iteration_bounds = array<i64: 2, 1, 2>, scalar_prefetch = 0 : i64, scratch_operands = 0 : i64, tpu.core_type = #tpu.core_type<tc>, window_params = [{transform_indices = @transform_0, window_bounds = array<i64: 1, 4, 128>}, {transform_indices = @transform_1, window_bounds = array<i64: 1, 1, 128>}, {transform_indices = @transform_2, window_bounds = array<i64: 1, 4, 128>}, {transform_indices = @transform_3, window_bounds = array<i64: 1, 4, 128>}]} {
    %c0 = arith.constant 0 : index
    %c0_0 = arith.constant 0 : index
    %c0_1 = arith.constant 0 : index
    %0 = vector.load %arg4[%c0, %c0_0, %c0_1] : memref<1x1x128xi8, #tpu.memory_space<vmem>>, vector<1x1x128xi8>
    %1 = arith.sitofp %0 : vector<1x1x128xi8> to vector<1x1x128xf32>
    %c0_2 = arith.constant 0 : index
    %c0_3 = arith.constant 0 : index
    %c0_4 = arith.constant 0 : index
    %2 = vector.load %arg3[%c0_2, %c0_3, %c0_4] : memref<1x4x128xf32, #tpu.memory_space<vmem>>, vector<1x4x128xf32>
    %3 = vector.broadcast %1 : vector<1x1x128xf32> to vector<1x4x128xf32>
    %4 = arith.mulf %2, %3 : vector<1x4x128xf32>
    %c0_5 = arith.constant 0 : index
    %c0_6 = arith.constant 0 : index
    %c0_7 = arith.constant 0 : index
    %5 = vector.load %arg5[%c0_5, %c0_6, %c0_7] : memref<1x4x128xf32, #tpu.memory_space<vmem>>, vector<1x4x128xf32>
    tpu.vector_store %arg5[%c0_5, %c0_6, %c0_7], %4 {strides = array<i32>} : memref<1x4x128xf32, #tpu.memory_space<vmem>>, vector<1x4x128xf32>,
    %6 = vector.shape_cast %1 : vector<1x1x128xf32> to vector<1x1x128xf32>
    %7 = vector.broadcast %6 : vector<1x1x128xf32> to vector<1x4x128xf32>
    %c0_8 = arith.constant 0 : index
    %c0_9 = arith.constant 0 : index
    %c0_10 = arith.constant 0 : index
    %8 = vector.load %arg6[%c0_8, %c0_9, %c0_10] : memref<1x4x128xf32, #tpu.memory_space<vmem>>, vector<1x4x128xf32>
    tpu.vector_store %arg6[%c0_8, %c0_9, %c0_10], %7 {strides = array<i32>} : memref<1x4x128xf32, #tpu.memory_space<vmem>>, vector<1x4x128xf32>,
    return
  }
  func.func @transform_0(%arg0: i32, %arg1: i32, %arg2: i32) -> (i32, i32, i32) {
    %c0_i32 = arith.constant 0 : i32
    return %arg0, %arg1, %arg2 : i32, i32, i32
  }
  func.func @transform_1(%arg0: i32, %arg1: i32, %arg2: i32) -> (i32, i32, i32) {
    %c0_i32 = arith.constant 0 : i32
    %c0_i32_0 = arith.constant 0 : i32
    return %arg0, %c0_i32, %arg2 : i32, i32, i32
  }
  func.func @transform_2(%arg0: i32, %arg1: i32, %arg2: i32) -> (i32, i32, i32) {
    %c0_i32 = arith.constant 0 : i32
    return %arg0, %arg1, %arg2 : i32, i32, i32
  }
  func.func @transform_3(%arg0: i32, %arg1: i32, %arg2: i32) -> (i32, i32, i32) {
    %c0_i32 = arith.constant 0 : i32
    return %arg0, %arg1, %arg2 : i32, i32, i32
  }
}

</mosaic_0001>

<llo_original>
// kernel: tpu_custom_call.1
$region0: #{tpu_custom_call.1}
  #allocation0 [shape = 'u32[]', space=smem, size = 0x4, offset = 0x4, fixed_abs, tag = 'smem constant byte address 0x4 - core index']
  #allocation1 [shape = 'u32[72,128]{1,0:T(1,128)}', space=vmem, size = 0x9000, scoped, tag = 'internal scratch']
  %s0 = inlined_call_operand.hbm [shape: f32[2,4,256], index: 0, kind: input, shape index: {}]
  %s1 = inlined_call_operand.vmem [shape: s8[2,1,256], index: 1, kind: input, shape index: {}]
  %s2 = inlined_call_operand.hbm [shape: f32[2,4,256], index: 2, kind: output, shape index: {0}]
  %s3 = inlined_call_operand.hbm [shape: f32[2,4,256], index: 3, kind: output, shape index: {1}]
  %4 = xla_tuple %s2, %s3
  %s5 = sld [smem:[#allocation0]]
  $region53: #{tpu_custom_call.1} parent=0
    _
  %s7 = ssub.s32 1, %s5
  %s8 = scalar_select 0, %s7, %s5
  $region1: #{tpu_custom_call.1} parent=0
    #allocation2 [shape = 'u8[4096]{0}', space=vmem, size = 0x1000, scoped, tag = 'input window, operand 0']
    #allocation3 [shape = 's32[2]{0}', space=sflag, size = 0x8, scoped, tag = 'scoped memory for tpu_custom_call.1']
    #allocation4 [shape = 's32[2]{0}', space=sflag, size = 0x8, scoped, tag = 'scoped memory for tpu_custom_call.1']
    #allocation5 [shape = 'u8[4096]{0}', space=vmem, size = 0x1000, scoped, tag = 'output window, operand 0']
    #allocation6 [shape = 'u8[4096]{0}', space=vmem, size = 0x1000, scoped, tag = 'output window, operand 1']
    #allocation7 [shape = 's32[2]{0}', space=sflag, size = 0x8, scoped, tag = 'scoped memory for tpu_custom_call.1']
    %9 = vsyncpa [#allocation3], 0
    %s10 = scalar_lea.sflag [#allocation3], 1
    %11 = vsyncpa %s10, 0
    %12 = vsyncpa [#allocation4], 0
    %s13 = scalar_lea.sflag [#allocation4], 1
    %14 = vsyncpa %s13, 0
    %15 = vsyncpa [#allocation7], 0
    %s16 = scalar_lea.sflag [#allocation7], 1
    %17 = vsyncpa %s16, 0
    loop: start=0, step=1, limit=6
    $region2: #{tpu_custom_call.1} parent=1 // loop_pre_header
      _
    $region3: #{tpu_custom_call.1} parent=1 // loop_header
      %s19 = sphi 0, %s23
      %p20 = scmp.ge.s32.totalorder %s19, 6
      %s26 = sphi 0, %s45
      %s27 = sphi 0, %s41
      %s28 = sphi 0, %s37
      %s29 = sphi 0, %s26
      %s30 = sphi 0, %s27
      %s31 = sphi 0, %s28
      %s32 = sphi 0, %s29
      %s33 = sphi 0, %s30
      %s34 = sphi 0, %s31
      %s52 = sphi 0, %s54
      %s55 = sphi 0, %s52
      %s56 = sphi 0, %s55
      %s72 = sphi 0, %s56
      %s80 = sphi 0, %s82
      %s83 = sphi 0, %s80
      %s84 = sphi 0, %s83
      %s100 = sphi 0, %s84
      %s110 = sphi 0, %s112
      %s113 = sphi 0, %s110
      %s114 = sphi 0, %s113
      %s130 = sphi 0, %s114
      %s140 = sphi 0, %s142
      %s143 = sphi 0, %s140
      %s144 = sphi 0, %s143
      %s160 = sphi 0, %s144
    $region4: #{tpu_custom_call.1} parent=1 // loop_header_branch
      %22 = sbr.rel (%p20) target = $region8
    $region5: #{tpu_custom_call.1} parent=1 // loop_body
      %s24 = ssub.s32 %s19, 1
      %s25 = ssub.s32 %s19, 2
      %s35 = sadd.s32 1, %s28
      %p36 = scmp.ge.s32.totalorder %s35, 2
      %s37 = scalar_select %p36, 0, %s35
      %s38 = sadd.s32 1, %s27
      %s39 = scalar_select %p36, %s38, %s27
      %p40 = scmp.ge.s32.totalorder %s39, 1
      %s41 = scalar_select %p40, 0, %s39
      %s42 = sadd.s32 1, %s26
      %s43 = scalar_select %p40, %s42, %s26
      %p44 = scmp.ge.s32.totalorder %s43, 2
      %s45 = scalar_select %p44, 0, %s43
      %s46 = ssub.s32 %s26, %s45
      %s47 = ssub.s32 %s27, %s41
      %s48 = sor.u32 %s46, %s47
      %s49 = ssub.s32 %s28, %s37
      %s50 = sor.u32 %s48, %s49
      %p51 = scmp.eq.s32.totalorder %s50, 0
      %s53 = sadd.s32 %s52, 1
      %s54 = scalar_select %p51, %s52, %s53
      %p57 = pneg %p51
      %p58 = scmp.eq.s32.totalorder %s19, 3
      %p59 = por %p57, %p58
      %p60 = scmp.ne.s32.totalorder %s52, %s55
      %p61 = scmp.eq.s32.totalorder %s19, 0
      %p62 = por %p60, %p61
      %p63 = scmp.ne.s32.totalorder %s52, %s55
      %p64 = scmp.eq.s32.totalorder %s24, 3
      %p65 = por %p63, %p64
      %p66 = scmp.ne.s32.totalorder %s55, %s56
      %p67 = scmp.eq.s32.totalorder %s24, 0
      %p68 = por %p66, %p67
      %p69 = scmp.ne.s32.totalorder %s55, %s56
      %p70 = scmp.eq.s32.totalorder %s25, 3
      %p71 = por %p69, %p70
      %p73 = scmp.ne.s32.totalorder %s56, %s72
      %p74 = scmp.eq.s32.totalorder %s25, 0
      %p75 = por %p73, %p74
      %s76 = ssub.s32 %s26, %s45
      %s77 = ssub.s32 %s28, %s37
      %s78 = sor.u32 %s76, %s77
      %p79 = scmp.eq.s32.totalorder %s78, 0
      %s81 = sadd.s32 %s80, 1
      %s82 = scalar_select %p79, %s80, %s81
      %p85 = pneg %p79
      %p86 = scmp.eq.s32.totalorder %s19, 3
      %p87 = por %p85, %p86
      %p88 = scmp.ne.s32.totalorder %s80, %s83
      %p89 = scmp.eq.s32.totalorder %s19, 0
      %p90 = por %p88, %p89
      %p91 = scmp.ne.s32.totalorder %s80, %s83
      %p92 = scmp.eq.s32.totalorder %s24, 3
      %p93 = por %p91, %p92
      %p94 = scmp.ne.s32.totalorder %s83, %s84
      %p95 = scmp.eq.s32.totalorder %s24, 0
      %p96 = por %p94, %p95
      %p97 = scmp.ne.s32.totalorder %s83, %s84
      %p98 = scmp.eq.s32.totalorder %s25, 3
      %p99 = por %p97, %p98
      %p101 = scmp.ne.s32.totalorder %s84, %s100
      %p102 = scmp.eq.s32.totalorder %s25, 0
      %p103 = por %p101, %p102
      %s104 = ssub.s32 %s26, %s45
      %s105 = ssub.s32 %s27, %s41
      %s106 = sor.u32 %s104, %s105
      %s107 = ssub.s32 %s28, %s37
      %s108 = sor.u32 %s106, %s107
      %p109 = scmp.eq.s32.totalorder %s108, 0
      %s111 = sadd.s32 %s110, 1
      %s112 = scalar_select %p109, %s110, %s111
      %p115 = pneg %p109
      %p116 = scmp.eq.s32.totalorder %s19, 3
      %p117 = por %p115, %p116
      %p118 = scmp.ne.s32.totalorder %s110, %s113
      %p119 = scmp.eq.s32.totalorder %s19, 0
      %p120 = por %p118, %p119
      %p121 = scmp.ne.s32.totalorder %s110, %s113
      %p122 = scmp.eq.s32.totalorder %s24, 3
      %p123 = por %p121, %p122
      %p124 = scmp.ne.s32.totalorder %s113, %s114
      %p125 = scmp.eq.s32.totalorder %s24, 0
      %p126 = por %p124, %p125
      %p127 = scmp.ne.s32.totalorder %s113, %s114
      %p128 = scmp.eq.s32.totalorder %s25, 3
      %p129 = por %p127, %p128
      %p131 = scmp.ne.s32.totalorder %s114, %s130
      %p132 = scmp.eq.s32.totalorder %s25, 0
      %p133 = por %p131, %p132
      %s134 = ssub.s32 %s26, %s45
      %s135 = ssub.s32 %s27, %s41
      %s136 = sor.u32 %s134, %s135
      %s137 = ssub.s32 %s28, %s37
      %s138 = sor.u32 %s136, %s137
      %p139 = scmp.eq.s32.totalorder %s138, 0
      %s141 = sadd.s32 %s140, 1
      %s142 = scalar_select %p139, %s140, %s141
      %p145 = pneg %p139
      %p146 = scmp.eq.s32.totalorder %s19, 3
      %p147 = por %p145, %p146
      %p148 = scmp.ne.s32.totalorder %s140, %s143
      %p149 = scmp.eq.s32.totalorder %s19, 0
      %p150 = por %p148, %p149
      %p151 = scmp.ne.s32.totalorder %s140, %s143
      %p152 = scmp.eq.s32.totalorder %s24, 3
      %p153 = por %p151, %p152
      %p154 = scmp.ne.s32.totalorder %s143, %s144
      %p155 = scmp.eq.s32.totalorder %s24, 0
      %p156 = por %p154, %p155
      %p157 = scmp.ne.s32.totalorder %s143, %s144
      %p158 = scmp.eq.s32.totalorder %s25, 3
      %p159 = por %p157, %p158
      %p161 = scmp.ne.s32.totalorder %s144, %s160
      %p162 = scmp.eq.s32.totalorder %s25, 0
      %p163 = por %p161, %p162
      %p164 = scmp.le.s32.totalorder 1, %s19
      %p165 = scmp.lt.s32.totalorder %s19, 5
      %p166 = pnand %p164, %p165
      %p167 = pneg %p166
      // Predicated region
      $region9: #{tpu_custom_call.1} parent=5 // pred_check
        _
      $region10: #{tpu_custom_call.1} parent=5 // pred_check_branch
        %169 = sbr.rel (%p166) target = $region12
      $region11: #{tpu_custom_call.1} parent=5 // pred_region
        %s170 = ssub.s32 %s19, 1
      $region12: #{tpu_custom_call.1} parent=5 // pred_fallthru
        _
      %p171 = scmp.lt.s32.totalorder %s19, 4
      // Predicated region
      $region13: #{tpu_custom_call.1} parent=5 // pred_check
        %p172 = pneg %p171
      $region14: #{tpu_custom_call.1} parent=5 // pred_check_branch
        %174 = sbr.rel (%p172) target = $region16
      $region15: #{tpu_custom_call.1} parent=5 // pred_region
        // Predicated region
        $region17: #{tpu_custom_call.1} parent=15 // pred_check
          %p175 = pneg %p62
        $region18: #{tpu_custom_call.1} parent=15 // pred_check_branch
          %177 = sbr.rel (%p175) target = $region20
        $region19: #{tpu_custom_call.1} parent=15 // pred_region
          %s178 = sand.u32 %s52, 1
          %s179 = scalar_lea.sflag [#allocation3], %s178
          %s180 = sand.u32 %s52, 1
          %s181 = smul.addr %s180, 4
          %s182 = scalar_lea.vmem [#allocation2], %s181
          %184 = vsyncadd %s179, 0
          %s185 = smul.addr %s27, 2
          %s186 = sadd.s32 %s28, %s185
          %s187 = smul.addr %s26, 2
          %s188 = sadd.s32 %s186, %s187
          %s189 = smul.addr %s188, 4
          %s190 = scalar_lea.hbm %s0, %s189
          %s192 = sshll.u32 %s190, 4
          %s193 = int_to_ptr.hbm [resolvable:$true] %s192
          %s194 = sshll.u32 %s182, 4
          %s195 = int_to_ptr.vmem [resolvable:$true] %s194
          %197 = dma.hbm_to_vmem [thread:$0]  %s193, 64, %s195, %s179
        $region20: #{tpu_custom_call.1} parent=15 // pred_fallthru
          _
        // Predicated region
        $region21: #{tpu_custom_call.1} parent=15 // pred_check
          %p198 = pneg %p90
        $region22: #{tpu_custom_call.1} parent=15 // pred_check_branch
          %200 = sbr.rel (%p198) target = $region24
        $region23: #{tpu_custom_call.1} parent=15 // pred_region
          %p201 = scmp.lt.s32.totalorder %s26, 1
          %s202 = scalar_select %p201, %s26, 1
          %p203 = scmp.lt.s32.totalorder %s28, 1
          %s204 = scalar_select %p203, %s28, 1
          %s205 = smul.addr %s202, 2
          %s206 = sadd.s32 %s204, %s205
          %s207 = scalar_lea.vmem %s1, %s206
        $region24: #{tpu_custom_call.1} parent=15 // pred_fallthru
          _
      $region16: #{tpu_custom_call.1} parent=5 // pred_fallthru
        _
      %p208 = scmp.le.s32.totalorder 1, %s19
      %p209 = scmp.lt.s32.totalorder %s19, 5
      %p210 = pnand %p208, %p209
      %p211 = pneg %p210
      // Predicated region
      $region25: #{tpu_custom_call.1} parent=5 // pred_check
        _
      $region26: #{tpu_custom_call.1} parent=5 // pred_check_branch
        %213 = sbr.rel (%p210) target = $region28
      $region27: #{tpu_custom_call.1} parent=5 // pred_region
        %s214 = ssub.s32 %s19, 1
        %s215 = sand.u32 %s55, 1
        %s216 = scalar_lea.sflag [#allocation3], %s215
        %s217 = sand.u32 %s55, 1
        %s218 = smul.addr %s217, 4
        %s219 = scalar_lea.vmem [#allocation2], %s218
        // Predicated region
        $region29: #{tpu_custom_call.1} parent=27 // pred_check
          %p220 = pneg %p68
        $region30: #{tpu_custom_call.1} parent=27 // pred_check_branch
          %222 = sbr.rel (%p220) target = $region32
        $region31: #{tpu_custom_call.1} parent=27 // pred_region
          %224 = dma.done %s216, 64
        $region32: #{tpu_custom_call.1} parent=27 // pred_fallthru
          _
        %s225 = sand.u32 %s55, 1
        %s226 = scalar_lea.sflag [#allocation3], %s225
        %s227 = sand.u32 %s55, 1
        %s228 = smul.addr %s227, 4
        %s229 = scalar_lea.vmem [#allocation2], %s228
        %p230 = pneg %p68
        %p231 = pneg %p65
        %p232 = scmp.lt.s32.totalorder %s29, 1
        %s233 = scalar_select %p232, %s29, 1
        %p234 = scmp.lt.s32.totalorder %s31, 1
        %s235 = scalar_select %p234, %s31, 1
        %s236 = smul.addr %s233, 2
        %s237 = sadd.s32 %s235, %s236
        %s238 = scalar_lea.vmem %s1, %s237
        %p239 = pneg %p96
        %p240 = pneg %p93
        %p241 = pneg %p126
        %p242 = pneg %p123
        %s243 = sand.u32 %s113, 1
        %s244 = scalar_lea.sflag [#allocation4], %s243
        %s245 = sand.u32 %s113, 1
        %s246 = smul.addr %s245, 4
        %s247 = scalar_lea.vmem [#allocation5], %s246
        %p248 = pneg %p156
        %p249 = pneg %p153
        %s250 = sand.u32 %s143, 1
        %s251 = scalar_lea.sflag [#allocation7], %s250
        %s252 = sand.u32 %s143, 1
        %s253 = smul.addr %s252, 4
        %s254 = scalar_lea.vmem [#allocation6], %s253
        %p255 = scmp.lt.s32.totalorder %s29, 1
        %s256 = scalar_select %p255, %s29, 1
        %p257 = scmp.lt.s32.totalorder %s31, 1
        %s258 = scalar_select %p257, %s31, 1
        %s259 = smul.addr %s256, 2
        %s260 = sadd.s32 %s258, %s259
        %s261 = scalar_lea.vmem %s1, %s260
        %v262 = vld [vmem:[%s261] sm:$0x1]
        %v263 = vunpack.c.0.s8 %v262
        %v264 = vcvt.s32.f32 %v263
        %v265 = vld [vmem:[%s219] sm:$0xf]
        %v266 = vperm.slane %v264, 0
        %v267 = vmul.f32 %v265, %v266
        %268 = vst [vmem:[%s247] sm:$0xf] %v267
        %269 = vst [vmem:[%s254] sm:$0xf] %v266
        %s270 = sand.u32 %s113, 1
        %s271 = scalar_lea.sflag [#allocation4], %s270
        %s272 = sand.u32 %s113, 1
        %s273 = smul.addr %s272, 4
        %s274 = scalar_lea.vmem [#allocation5], %s273
        %s275 = sand.u32 %s143, 1
        %s276 = scalar_lea.sflag [#allocation7], %s275
        %s277 = sand.u32 %s143, 1
        %s278 = smul.addr %s277, 4
        %s279 = scalar_lea.vmem [#allocation6], %s278
        // Predicated region
        $region33: #{tpu_custom_call.1} parent=27 // pred_check
          %p280 = pneg %p123
        $region34: #{tpu_custom_call.1} parent=27 // pred_check_branch
          %282 = sbr.rel (%p280) target = $region36
        $region35: #{tpu_custom_call.1} parent=27 // pred_region
          %284 = vsyncadd %s271, 0
          %s285 = smul.addr %s30, 2
          %s286 = sadd.s32 %s31, %s285
          %s287 = smul.addr %s29, 2
          %s288 = sadd.s32 %s286, %s287
          %s289 = smul.addr %s288, 4
          %s290 = scalar_lea.hbm %s2, %s289
          %s292 = sshll.u32 %s274, 4
          %s293 = int_to_ptr.vmem [resolvable:$true] %s292
          %s294 = sshll.u32 %s290, 4
          %s295 = int_to_ptr.hbm [resolvable:$true] %s294
          %297 = dma.vmem_to_hbm [thread:$0]  %s293, 64, %s295, %s271
        $region36: #{tpu_custom_call.1} parent=27 // pred_fallthru
          _
        // Predicated region
        $region37: #{tpu_custom_call.1} parent=27 // pred_check
          %p298 = pneg %p153
        $region38: #{tpu_custom_call.1} parent=27 // pred_check_branch
          %300 = sbr.rel (%p298) target = $region40
        $region39: #{tpu_custom_call.1} parent=27 // pred_region
          %302 = vsyncadd %s276, 0
          %s303 = smul.addr %s30, 2
          %s304 = sadd.s32 %s31, %s303
          %s305 = smul.addr %s29, 2
          %s306 = sadd.s32 %s304, %s305
          %s307 = smul.addr %s306, 4
          %s308 = scalar_lea.hbm %s3, %s307
          %s310 = sshll.u32 %s279, 4
          %s311 = int_to_ptr.vmem [resolvable:$true] %s310
          %s312 = sshll.u32 %s308, 4
          %s313 = int_to_ptr.hbm [resolvable:$true] %s312
          %315 = dma.vmem_to_hbm [thread:$0]  %s311, 64, %s313, %s276
        $region40: #{tpu_custom_call.1} parent=27 // pred_fallthru
          _
      $region28: #{tpu_custom_call.1} parent=5 // pred_fallthru
        _
      %p316 = scmp.le.s32.totalorder 2, %s19
      // Predicated region
      $region41: #{tpu_custom_call.1} parent=5 // pred_check
        %p317 = pneg %p316
      $region42: #{tpu_custom_call.1} parent=5 // pred_check_branch
        %319 = sbr.rel (%p317) target = $region44
      $region43: #{tpu_custom_call.1} parent=5 // pred_region
        %s320 = ssub.s32 %s19, 2
        // Predicated region
        $region45: #{tpu_custom_call.1} parent=43 // pred_check
          %p321 = pneg %p129
        $region46: #{tpu_custom_call.1} parent=43 // pred_check_branch
          %323 = sbr.rel (%p321) target = $region48
        $region47: #{tpu_custom_call.1} parent=43 // pred_region
          %s324 = sand.u32 %s114, 1
          %s325 = scalar_lea.sflag [#allocation4], %s324
          %s326 = sand.u32 %s114, 1
          %s327 = smul.addr %s326, 4
          %s328 = scalar_lea.vmem [#allocation5], %s327
          %330 = dma.done %s325, 64
        $region48: #{tpu_custom_call.1} parent=43 // pred_fallthru
          _
        // Predicated region
        $region49: #{tpu_custom_call.1} parent=43 // pred_check
          %p331 = pneg %p159
        $region50: #{tpu_custom_call.1} parent=43 // pred_check_branch
          %333 = sbr.rel (%p331) target = $region52
        $region51: #{tpu_custom_call.1} parent=43 // pred_region
          %s334 = sand.u32 %s144, 1
          %s335 = scalar_lea.sflag [#allocation7], %s334
          %s336 = sand.u32 %s144, 1
          %s337 = smul.addr %s336, 4
          %s338 = scalar_lea.vmem [#allocation6], %s337
          %340 = dma.done %s335, 64
        $region52: #{tpu_custom_call.1} parent=43 // pred_fallthru
          _
      $region44: #{tpu_custom_call.1} parent=5 // pred_fallthru
        _
    $region6: #{tpu_custom_call.1} parent=1 // loop_footer
      %s23 = sadd.s32 1, %s19
    $region7: #{tpu_custom_call.1} parent=1 // loop_footer_branch
      %18 = sbr.rel target = $region3
    $region8: #{tpu_custom_call.1} parent=1 // loop_exit
      _
    %341 = vsyncpa [#allocation3], 1
    %s342 = scalar_lea.sflag [#allocation3], 1
    %343 = vsyncpa %s342, 1
    %344 = vsyncpa [#allocation4], 1
    %s345 = scalar_lea.sflag [#allocation4], 1
    %346 = vsyncpa %s345, 1
    %347 = vsyncpa [#allocation7], 1
    %s348 = scalar_lea.sflag [#allocation7], 1
    %349 = vsyncpa %s348, 1

</llo_original>
